<compile_context>
chip_gen: v5e
topology: v5e:2x2
jax: 0.10.0
libtpu: 0.0.40
codegen_flags: <defaults>
</compile_context>

<pallas_src>
import functools

import jax
import jax.numpy as jnp
from jax.experimental import pallas as pl
from jax.experimental.pallas import tpu as pltpu

# Finite "very far away" squared distance assigned to padded cluster columns so
# they contribute ~0 to the row sums without an in-kernel mask.  Finite (not
# inf) so the reciprocal / log1p / exp paths never see inf*0 or NaN.
_PAD_DIST_SQ = 1e30


def _round_up(v: int, m: int) -> int:
    return (v + m - 1) // m * m


def _idec_kernel(x_ref, ct_ref, csq_ref, q_ref, *, inv_alpha: float,
                 power: float, n_valid: int):
    # x_ref:   (TN, D)  input dtype
    # ct_ref:  (D, Kp)  input dtype (centers, pre-transposed, resident)
    # csq_ref: (1, Kp)  f32 (||c||^2, padded cols = _PAD_DIST_SQ, resident)
    # q_ref:   (TN, K)  f32 (narrow, unpadded output tile)
    x = x_ref[...]

    # x . c^T on the MXU in the input dtype, f32 accumulation, standard
    # (((1,),(0,)),((),())) contraction -> no in-kernel relayout of centers.
    xc = jnp.dot(x, ct_ref[...], preferred_element_type=jnp.float32)  # (TN, Kp)

    # ||x||^2 per row (f32 epilogue).
    x_f32 = x.astype(jnp.float32)
    x_sq = jnp.sum(x_f32 * x_f32, axis=-1, keepdims=True)             # (TN, 1)

    # Squared distances; clamp cancellation-induced negatives to 0.
    dist_sq = jnp.maximum(x_sq + csq_ref[...] - 2.0 * xc, 0.0)        # (TN, Kp)
    t = dist_sq * inv_alpha

    if power == 1.0:
        # Default alpha=1: q = 1/(1+t).  EUP vrcp seed + one Newton step gives
        # ~f32 accuracy while keeping the elementwise divide off the VPU.
        a = 1.0 + t
        r = pl.reciprocal(a, approx=True)
        q = r * (2.0 - a * r)
    else:
        # General alpha: (1+t)^(-power) = exp(-power * log1p(t)); the heavy
        # ops stay on the otherwise-idle EUP slot.
        q = jnp.exp(-power * jnp.log1p(t))

    # Padded cluster columns have dist_sq ~ 1e30 -> q ~ 1e-30: negligible in
    # the row sums, so no explicit mask is needed.
    row_sum = jnp.sum(q, axis=-1, keepdims=True)                      # (TN, 1)
    inv_sum = pl.reciprocal(row_sum, approx=False)                    # exact

    # Narrow store: only the K valid columns are written back to HBM.
    q_ref[...] = (q[:, :n_valid] * inv_sum).astype(q_ref.dtype)


def idec_forward(x, cluster_centers, alpha: float = 1.0, tile_n: int = 1024):
    """Pallas implementation of IDEC.forward.

    x:               (N, D) embeddings.
    cluster_centers: (K, D) cluster centers.
    returns:         (N, K) soft-assignment probabilities (f32).
    """
    n, d = x.shape
    k, d2 = cluster_centers.shape
    assert d == d2, "bottleneck dims must match"

    # Row-tile: multiple of 8 sublanes, large by default (fewer grid steps),
    # but capped so there are >= 2 grid steps whenever the batch can be split
    # into two >=8-row tiles (v7x has 2 TensorCores sharding the parallel axis).
    n_r8 = _round_up(n, 8)
    tn = min(_round_up(tile_n, 8), n_r8)
    if n_r8 >= 16 and tn >= n_r8:
        tn = _round_up((n_r8 + 1) // 2, 8)
    n_pad = _round_up(n, tn)

    # Lane-aligned cluster axis for the MXU / VPU intermediates.
    kp = _round_up(k, 128)

    x_p = x if n_pad == n else jnp.pad(x, ((0, n_pad - n), (0, 0)))

    c_p = cluster_centers.astype(x.dtype)  # matmul runs in the input dtype
    if kp != k:
        c_p = jnp.pad(c_p, ((0, kp - k), (0, 0)))

    # ||c||^2 hoisted to the wrapper (computed once).  Padded columns get a
    # large finite distance so they vanish from the row sums in-kernel.
    c_f32 = c_p.astype(jnp.float32)
    c_sq = jnp.sum(c_f32 * c_f32, axis=-1)
    if kp != k:
        c_sq = jnp.where(jnp.arange(kp) < k, c_sq, _PAD_DIST_SQ)
    c_sq = c_sq[None, :]                                              # (1, Kp)

    # Pre-transpose centers once in the wrapper -> (D, Kp); the kernel then
    # uses the standard contraction with no per-grid-step relayout.
    c_t = c_p.T

    # Explicit VMEM budget: double-buffered x / q tiles, resident centers and
    # f32 intermediates (xc, dist_sq, q, ...).  Floor 32 MiB (above every
    # generation's default scoped limit), cap 48 MiB (inside v7x's 64 MiB
    # physical VMEM per TensorCore).
    # NOTE: for realistic IDEC (K<=~1000, D<=~512) resident centers are tiny;
    # if Kp*D ever grows beyond this budget, add a cluster-tile grid axis
    # marked "arbitrary" with a VMEM row-sum scratch instead.
    in_bytes = jnp.dtype(x_p.dtype).itemsize
    vmem_bytes = (
        2 * tn * d * in_bytes      # x tile, double-buffered
        + 2 * d * kp * in_bytes    # resident centers (conservatively x2)
        + 2 * kp * 4               # ||c||^2
        + 2 * tn * k * 4           # q output tile, double-buffered
        + 6 * tn * kp * 4          # f32 intermediates
    )
    vmem_limit = int(min(max(vmem_bytes + (2 << 20), 32 << 20), 48 << 20))

    kernel = functools.partial(
        _idec_kernel,
        inv_alpha=1.0 / float(alpha),
        power=(float(alpha) + 1.0) / 2.0,
        n_valid=k,
    )

    q_pad = pl.pallas_call(
        kernel,
        out_shape=jax.ShapeDtypeStruct((n_pad, k), jnp.float32),
        grid=(n_pad // tn,),
        in_specs=[
            pl.BlockSpec((tn, d), lambda i: (i, 0)),   # x row-tile
            pl.BlockSpec((d, kp), lambda i: (0, 0)),   # centers^T (resident)
            pl.BlockSpec((1, kp), lambda i: (0, 0)),   # ||c||^2 (resident)
        ],
        out_specs=pl.BlockSpec((tn, k), lambda i: (i, 0)),  # narrow output
        compiler_params=pltpu.CompilerParams(
            dimension_semantics=("parallel",),
            vmem_limit_bytes=vmem_limit,
        ),
    )(x_p, c_t, c_sq)

    return q_pad if n_pad == n else q_pad[:n]


def idec_forward_ref(x, cluster_centers, alpha: float = 1.0):
    """Pure-JAX reference mirroring the PyTorch forward exactly."""
    diff = x[:, None, :] - cluster_centers[None, :, :]
    q = 1.0 / (1.0 + jnp.sum(diff * diff, axis=2) / alpha)
    q = jnp.power(q, (alpha + 1.0) / 2.0)
    q = q / jnp.sum(q, axis=1, keepdims=True)
    return q


if __name__ == "__main__":
    # Module hyperparameters (synthetic, deterministic init — no checkpoint).
    n_clusters = 4
    bottleneck_size = 32
    alpha = 1.0
    batch = 8

    # Deterministic parameter init (stand-in for torch.manual_seed(42) randn).
    cluster_centers = jax.random.normal(
        jax.random.PRNGKey(42), (n_clusters, bottleneck_size), dtype=jnp.float32
    )
    # Deterministic example input embeddings.
    x = jax.random.normal(
        jax.random.PRNGKey(0), (batch, bottleneck_size), dtype=jnp.float32
    )

    q = jax.block_until_ready(idec_forward(x, cluster_centers, alpha=alpha))

    q_ref = idec_forward_ref(x, cluster_centers, alpha=alpha)
    assert q.shape == (batch, n_clusters)
    assert jnp.allclose(q, q_ref, atol=1e-5, rtol=1e-5), "mismatch vs reference"
    assert jnp.allclose(jnp.sum(q, axis=1), 1.0, atol=1e-5), "rows must sum to 1"

    # Second small case exercising multi-tile grid, row padding and the
    # narrow-column output path.
    k2, d2, n2 = 10, 48, 200
    c2 = jax.random.normal(jax.random.PRNGKey(1), (k2, d2), dtype=jnp.float32)
    x2 = jax.random.normal(jax.random.PRNGKey(2), (n2, d2), dtype=jnp.float32)
    q2 = jax.block_until_ready(idec_forward(x2, c2, alpha=alpha))
    q2_ref = idec_forward_ref(x2, c2, alpha=alpha)
    assert q2.shape == (n2, k2)
    assert jnp.allclose(q2, q2_ref, atol=1e-5, rtol=1e-5), "mismatch (case 2)"

    print("KERNEL_OK")
</pallas_src>

<mosaic_0001>
module attributes {stable_mosaic.version = 11 : i64} {
  func.func @_idec_kernel(%arg0: i32, %arg1: memref<8x32xf32, #tpu.memory_space<vmem>>, %arg2: memref<32x128xf32, #tpu.memory_space<vmem>>, %arg3: memref<1x128xf32, #tpu.memory_space<vmem>>, %arg4: memref<8x4xf32, #tpu.memory_space<vmem>>) attributes {dimension_semantics = [#tpu.dimension_semantics<parallel>], iteration_bounds = array<i64: 1>, scalar_prefetch = 0 : i64, scratch_operands = 0 : i64, tpu.core_type = #tpu.core_type<tc>, window_params = [{transform_indices = @transform_0, window_bounds = array<i64: 8, 32>}, {pipeline_mode = #tpu.pipeline_mode<synchronous>, transform_indices = @transform_1, window_bounds = array<i64: 32, 128>}, {pipeline_mode = #tpu.pipeline_mode<synchronous>, transform_indices = @transform_2, window_bounds = array<i64: 1, 128>}, {transform_indices = @transform_3, window_bounds = array<i64: 8, 4>}]} {
    %c0 = arith.constant 0 : index
    %c0_0 = arith.constant 0 : index
    %0 = vector.load %arg1[%c0, %c0_0] : memref<8x32xf32, #tpu.memory_space<vmem>>, vector<8x32xf32>
    %c0_1 = arith.constant 0 : index
    %c0_2 = arith.constant 0 : index
    %1 = vector.load %arg2[%c0_1, %c0_2] : memref<32x128xf32, #tpu.memory_space<vmem>>, vector<32x128xf32>
    %cst = arith.constant dense<0.000000e+00> : vector<8x128xf32>
    %2 = tpu.matmul %0, %1, %cst {dimension_numbers = #tpu.dot_dimension_numbers<[1], [0], [0], [1], [0, 0, 1, 1], [], []>} : vector<8x32xf32>, vector<32x128xf32>, vector<8x128xf32> -> vector<8x128xf32>
    %3 = arith.mulf %0, %0 : vector<8x32xf32>
    %cst_3 = arith.constant dense<0.000000e+00> : vector<8xf32>
    %4 = vector.multi_reduction <add>, %3, %cst_3 [1] : vector<8x32xf32> to vector<8xf32>
    %5 = vector.shape_cast %4 : vector<8xf32> to vector<8x1xf32>
    %c0_4 = arith.constant 0 : index
    %c0_5 = arith.constant 0 : index
    %6 = vector.load %arg3[%c0_4, %c0_5] : memref<1x128xf32, #tpu.memory_space<vmem>>, vector<1x128xf32>
    %7 = vector.broadcast %5 : vector<8x1xf32> to vector<8x128xf32>
    %8 = vector.broadcast %6 : vector<1x128xf32> to vector<8x128xf32>
    %9 = arith.addf %7, %8 : vector<8x128xf32>
    %cst_6 = arith.constant 2.000000e+00 : f32
    %10 = vector.broadcast %cst_6 : f32 to vector<8x128xf32>
    %11 = arith.mulf %10, %2 : vector<8x128xf32>
    %12 = arith.subf %9, %11 : vector<8x128xf32>
    %cst_7 = arith.constant 0.000000e+00 : f32
    %13 = vector.broadcast %cst_7 : f32 to vector<8x128xf32>
    %14 = arith.maximumf %12, %13 : vector<8x128xf32>
    %cst_8 = arith.constant 1.000000e+00 : f32
    %15 = vector.broadcast %cst_8 : f32 to vector<8x128xf32>
    %16 = arith.mulf %14, %15 : vector<8x128xf32>
    %cst_9 = arith.constant 1.000000e+00 : f32
    %17 = vector.broadcast %cst_9 : f32 to vector<8x128xf32>
    %18 = arith.addf %17, %16 : vector<8x128xf32>
    %19 = tpu.reciprocal %18 {approx = true} : vector<8x128xf32> -> vector<8x128xf32>
    %20 = arith.mulf %18, %19 : vector<8x128xf32>
    %cst_10 = arith.constant 2.000000e+00 : f32
    %21 = vector.broadcast %cst_10 : f32 to vector<8x128xf32>
    %22 = arith.subf %21, %20 : vector<8x128xf32>
    %23 = arith.mulf %19, %22 : vector<8x128xf32>
    %cst_11 = arith.constant dense<0.000000e+00> : vector<8xf32>
    %24 = vector.multi_reduction <add>, %23, %cst_11 [1] : vector<8x128xf32> to vector<8xf32>
    %25 = vector.shape_cast %24 : vector<8xf32> to vector<8x1xf32>
    %26 = tpu.reciprocal %25 : vector<8x1xf32> -> vector<8x1xf32>
    %27 = vector.extract_strided_slice %23 {offsets = [0, 0], sizes = [8, 4], strides = [1, 1]} : vector<8x128xf32> to vector<8x4xf32>
    %28 = vector.broadcast %26 : vector<8x1xf32> to vector<8x4xf32>
    %29 = arith.mulf %27, %28 : vector<8x4xf32>
    %c0_12 = arith.constant 0 : index
    %c0_13 = arith.constant 0 : index
    %30 = vector.load %arg4[%c0_12, %c0_13] : memref<8x4xf32, #tpu.memory_space<vmem>>, vector<8x4xf32>
    tpu.vector_store %arg4[%c0_12, %c0_13], %29 {strides = array<i32>} : memref<8x4xf32, #tpu.memory_space<vmem>>, vector<8x4xf32>,
    return
  }
  func.func @transform_0(%arg0: i32) -> (i32, i32) {
    %c0_i32 = arith.constant 0 : i32
    %c0_i32_0 = arith.constant 0 : i32
    return %arg0, %c0_i32 : i32, i32
  }
  func.func @transform_1(%arg0: i32) -> (i32, i32) {
    %c0_i32 = arith.constant 0 : i32
    %c0_i32_0 = arith.constant 0 : i32
    %c0_i32_1 = arith.constant 0 : i32
    return %c0_i32, %c0_i32_0 : i32, i32
  }
  func.func @transform_2(%arg0: i32) -> (i32, i32) {
    %c0_i32 = arith.constant 0 : i32
    %c0_i32_0 = arith.constant 0 : i32
    %c0_i32_1 = arith.constant 0 : i32
    return %c0_i32, %c0_i32_0 : i32, i32
  }
  func.func @transform_3(%arg0: i32) -> (i32, i32) {
    %c0_i32 = arith.constant 0 : i32
    %c0_i32_0 = arith.constant 0 : i32
    return %arg0, %c0_i32 : i32, i32
  }
}

</mosaic_0001>

<llo_original>
// kernel: tpu_custom_call.1
$region0: #{tpu_custom_call.1}
  #allocation0 [shape = 'u32[]', space=smem, size = 0x4, offset = 0x4, fixed_abs, tag = 'smem constant byte address 0x4 - core index']
  #allocation1 [shape = 'u32[72,128]{1,0:T(1,128)}', space=vmem, size = 0x9000, scoped, tag = 'internal scratch']
  %s0 = inlined_call_operand.hbm [shape: f32[8,32], index: 0, kind: input, shape index: {}]
  %s1 = inlined_call_operand.hbm [shape: f32[32,128], index: 1, kind: input, shape index: {}]
  %s2 = inlined_call_operand.vmem [shape: f32[1,128], index: 2, kind: input, shape index: {}]
  %s3 = inlined_call_operand.vmem [shape: f32[8,4], index: 3, kind: output, shape index: {}]
  %s4 = sld [smem:[#allocation0]]
  $region30: #{tpu_custom_call.1} parent=0
    _
  %s6 = ssub.s32 1, %s4
  %s7 = scalar_select 0, %s6, %s4
  $region1: #{tpu_custom_call.1} parent=0
    #allocation2 [shape = 'u8[4096]{0}', space=vmem, size = 0x1000, scoped, tag = 'input window, operand 0, single buffered']
    #allocation3 [shape = 's32[1]{0}', space=sflag, size = 0x4, scoped, tag = 'scoped memory for tpu_custom_call.1']
    #allocation4 [shape = 'u8[16384]{0}', space=vmem, size = 0x4000, scoped, tag = 'input window, operand 1, single buffered']
    #allocation5 [shape = 's32[1]{0}', space=sflag, size = 0x4, scoped, tag = 'scoped memory for tpu_custom_call.1']
    %8 = vsyncpa [#allocation3], 0
    %9 = vsyncpa [#allocation5], 0
    // Predicated region
    $region2: #{tpu_custom_call.1} parent=1 // pred_check
      _
    $region3: #{tpu_custom_call.1} parent=1 // pred_check_branch
      %11 = sbr.rel (0) target = $region5
    $region4: #{tpu_custom_call.1} parent=1 // pred_region
      %13 = vsyncadd [#allocation3], 0
      %s15 = sshll.u32 %s0, 4
      %s16 = int_to_ptr.hbm [resolvable:$true] %s15
      %s17 = sshll.u32 [#allocation2], 4
      %s18 = int_to_ptr.vmem [resolvable:$true] %s17
      %20 = dma.hbm_to_vmem [thread:$0]  %s16, 128, %s18, [#allocation3]
    $region5: #{tpu_custom_call.1} parent=1 // pred_fallthru
      _
    // Predicated region
    $region6: #{tpu_custom_call.1} parent=1 // pred_check
      _
    $region7: #{tpu_custom_call.1} parent=1 // pred_check_branch
      %22 = sbr.rel (0) target = $region9
    $region8: #{tpu_custom_call.1} parent=1 // pred_region
      %24 = vsyncadd [#allocation5], 0
      %s25 = sshll.u32 %s1, 4
      %s26 = int_to_ptr.hbm [resolvable:$true] %s25
      %s27 = sshll.u32 [#allocation4], 4
      %s28 = int_to_ptr.vmem [resolvable:$true] %s27
      %33 = dma.hbm_to_vmem [thread:$0]  %s26, 512, %s28, [#allocation5], 128, 128, 8
    $region9: #{tpu_custom_call.1} parent=1 // pred_fallthru
      _
    // Predicated region
    $region10: #{tpu_custom_call.1} parent=1 // pred_check
      _
    $region11: #{tpu_custom_call.1} parent=1 // pred_check_branch
      %35 = sbr.rel (0) target = $region13
    $region12: #{tpu_custom_call.1} parent=1 // pred_region
      _
    $region13: #{tpu_custom_call.1} parent=1 // pred_fallthru
      _
    // Predicated region
    $region14: #{tpu_custom_call.1} parent=1 // pred_check
      _
    $region15: #{tpu_custom_call.1} parent=1 // pred_check_branch
      %37 = sbr.rel (0) target = $region17
    $region16: #{tpu_custom_call.1} parent=1 // pred_region
      %39 = dma.done [#allocation3], 128
    $region17: #{tpu_custom_call.1} parent=1 // pred_fallthru
      _
    // Predicated region
    $region18: #{tpu_custom_call.1} parent=1 // pred_check
      _
    $region19: #{tpu_custom_call.1} parent=1 // pred_check_branch
      %41 = sbr.rel (0) target = $region21
    $region20: #{tpu_custom_call.1} parent=1 // pred_region
      %43 = dma.done [#allocation5], 512
    $region21: #{tpu_custom_call.1} parent=1 // pred_fallthru
      _
    %v44 = vld [vmem:[#allocation2] sm:$0xff]
    %v45 = vld [vmem:[#allocation4] sm:$0xff]
    %v46 = vld [vmem:[#allocation4 + $0x8] sm:$0xff]
    %v47 = vld [vmem:[#allocation4 + $0x10] sm:$0xff]
    %v48 = vld [vmem:[#allocation4 + $0x18] sm:$0xff]
    %vm49 = vcmask 261120
    %v51 = vsel %vm49, %v44, 0
    %53 = vmatpush.msra.mxu0 0.0
    %54 = vmatpush.msra.mxu0 0.0
    %55 = vmatpush.msra.mxu0 0.0
    %56 = vmatpush.msra.mxu0 0.0
    %57 = vmatpush.msra.mxu0 0.0
    %58 = vmatpush.msra.mxu0 0.0
    %59 = vmatpush.msra.mxu0 0.0
    %60 = vmatpush.msra.mxu0 0.0
    %61 = vmatpush.msra.mxu0 0.0
    %62 = vmatpush.msra.mxu0 0.0
    %63 = vmatpush.msra.mxu0 0.0
    %64 = vmatpush.msra.mxu0 0.0
    %65 = vmatpush.msra.mxu0 %v48
    %66 = vmatpush.msra.mxu0 %v47
    %67 = vmatpush.msra.mxu0 %v46
    %68 = vmatpush.msra.mxu0 %v45
    %69 = vmatmul.f32.gmra.mxu0 %v51
    %v70 = vpop.f32.mrf.mxu0
    %v71 = vadd.f32 0.0, %v70
    %72 = vdwg.mxu0
    %v73 = vmul.f32 %v44, %v44
    %v74 = vsel %vm49, %v73, 0.0
    %75 = vadd.xlane.f32.xlu0 %v74
    %v76 = vpop.xlane.xlu0 %75
    %v77 = vld [vmem:[%s2] sm:$0x1]
    %v79 = vperm.slane %v77, 0
    %v81 = vadd.f32 %v76, %v79
    %v82 = vmul.f32 %v71, 2.0
    %v83 = vsub.f32 %v81, %v82
    %v84 = vmax.f32 %v83, 0.0
    %v85 = vadd.f32 %v84, 1.0
    %v86 = vrcp.pop %v85
    %v87 = vmul.f32 %v85, %v86
    %v88 = vsub.f32 2.0, %v87
    %v89 = vmul.f32 %v86, %v88
    %90 = vadd.xlane.f32.xlu0 %v89
    %v91 = vpop.xlane.xlu0 %90
    %v92 = vrcp.pop %v91
    %v93 = vmul.f32 %v91, %v92
    %v94 = vsub.f32 1.0, %v93
    %v95 = vmul.f32 %v92, %v94
    %v96 = vadd.f32 %v92, %v95
    %vm97 = vweird.f32 %v91
    %vm98 = vweird.f32 %v92
    %vm99 = vmor %vm97, %vm98
    %v100 = vsel %vm99, %v92, %v96
    %v101 = vand.u32 2147483647, %v91
    %vm102 = vcmp.eq.f32.partialorder %v101, 8.507059e+37
    %v103 = vand.u32 %v91, 2147483648
    %v104 = vor.u32 1.1754944e-38, %v103
    %v105 = vsel %vm102, %v104, %v100
    %v106 = vmul.f32 %v89, %v105
    %vm107 = vcmask 31744
    %108 = vst.msk [vmem:[%s3] sm:$0xff] %vm107, %v106
    // Predicated region
    $region22: #{tpu_custom_call.1} parent=1 // pred_check
      _
    $region23: #{tpu_custom_call.1} parent=1 // pred_check_branch
      %110 = sbr.rel (0) target = $region25
    $region24: #{tpu_custom_call.1} parent=1 // pred_region
      _
    $region25: #{tpu_custom_call.1} parent=1 // pred_fallthru
      _
    // Predicated region
    $region26: #{tpu_custom_call.1} parent=1 // pred_check
      _
    $region27: #{tpu_custom_call.1} parent=1 // pred_check_branch
      %112 = sbr.rel (0) target = $region29
    $region28: #{tpu_custom_call.1} parent=1 // pred_region
      _
    $region29: #{tpu_custom_call.1} parent=1 // pred_fallthru
      _
    %113 = vsyncpa [#allocation3], 1
    %114 = vsyncpa [#allocation5], 1

</llo_original>
